<compile_context>
chip_gen: v7x
topology: tpu7x:2x2x1
jax: 0.10.0
libtpu: 0.0.40
codegen_flags: <defaults>
</compile_context>

<pallas_src>
import jax
import jax.numpy as jnp
from jax.experimental import pallas as pl
from jax.experimental.pallas import tpu as pltpu

EPS = 1e-5  # F.batch_norm default


# ----------------------------------------------------------------------------
# Kernels
# ----------------------------------------------------------------------------
def _bn2d_fused_kernel(x_ref, w_ref, b_ref, o_ref):
    """x_ref: (N, TC, HW); w_ref/b_ref: (1, TC, 1); o_ref: (N, TC, HW)."""
    N, TC, HW = x_ref.shape
    inv_count = 1.0 / float(N * HW)

    # --- Pass 1: fused per-channel sum & sum-of-squares (f32 accumulation).
    # Reduce over N first with plain VPU adds on (TC, HW) slabs, then exactly
    # one cross-lane (XLU) reduction over HW.  The cast is fused into the
    # reduction; no full-block f32 copy of x is kept live.
    s = jnp.zeros((TC, HW), jnp.float32)
    ss = jnp.zeros((TC, HW), jnp.float32)
    for n in range(N):                               # static trip count
        xn = x_ref[n].astype(jnp.float32)            # (TC, HW) slab
        s = s + xn
        ss = ss + xn * xn
    ssum = jnp.sum(s, axis=-1, keepdims=True)        # (TC, 1)
    sqsum = jnp.sum(ss, axis=-1, keepdims=True)      # (TC, 1)

    mean = ssum * inv_count
    # var = E[x^2] - mean^2 (biased); clamp for cancellation safety.
    var = jnp.maximum(sqsum * inv_count - mean * mean, 0.0)
    inv = jax.lax.rsqrt(var + EPS)

    # Fold the affine into one per-channel scale/shift: 2 VPU ops per element.
    scale = inv * w_ref[0].astype(jnp.float32)                     # (TC, 1)
    shift = b_ref[0].astype(jnp.float32) - mean * scale            # (TC, 1)

    # --- Pass 2: normalize.  Re-read x; bf16 inputs stay bf16 on the VPU
    # (v6e/v7x native; Mosaic widens on v5e), halving element ops & vregs.
    cdt = jnp.bfloat16 if x_ref.dtype == jnp.bfloat16 else jnp.float32
    scale_c = scale.astype(cdt)
    shift_c = shift.astype(cdt)
    for n in range(N):
        o_ref[n] = (x_ref[n].astype(cdt) * scale_c + shift_c).astype(o_ref.dtype)


def _bn2d_stats_kernel(x_ref, sum_ref, ssq_ref):
    """Two-phase path, phase A.  x_ref: (TN, TC, HW); sum/ssq: (TC, 1) f32,
    resident (accumulated) across the batch-reduction grid axis."""
    @pl.when(pl.program_id(1) == 0)
    def _():
        sum_ref[...] = jnp.zeros_like(sum_ref)
        ssq_ref[...] = jnp.zeros_like(ssq_ref)

    TN, TC, HW = x_ref.shape
    s = jnp.zeros((TC, HW), jnp.float32)
    ss = jnp.zeros((TC, HW), jnp.float32)
    for n in range(TN):
        xn = x_ref[n].astype(jnp.float32)
        s = s + xn
        ss = ss + xn * xn
    sum_ref[...] += jnp.sum(s, axis=-1, keepdims=True)
    ssq_ref[...] += jnp.sum(ss, axis=-1, keepdims=True)


def _bn2d_norm_kernel(x_ref, scale_ref, shift_ref, o_ref):
    """Two-phase path, phase B.  x_ref/o_ref: (TN, TC, HW); scale/shift: (1, TC, 1)."""
    cdt = jnp.bfloat16 if x_ref.dtype == jnp.bfloat16 else jnp.float32
    scale = scale_ref[0].astype(cdt)     # (TC, 1)
    shift = shift_ref[0].astype(cdt)     # (TC, 1)
    TN = x_ref.shape[0]
    for n in range(TN):
        o_ref[n] = (x_ref[n].astype(cdt) * scale + shift).astype(o_ref.dtype)


# ----------------------------------------------------------------------------
# Tiling / budget selection (generation aware)
# ----------------------------------------------------------------------------
def _vmem_budgets():
    """Returns (per-block budget bytes, scoped vmem_limit_bytes).

    Sized so that 2x-in + 2x-out double-buffered blocks plus the in-kernel
    f32 (TC, HW) accumulators stay comfortably under the scoped limit."""
    vmem_cap = 64 << 20
    try:
        info = pltpu.get_tpu_info()
        vmem_cap = int(getattr(info, "vmem_capacity_bytes", vmem_cap))
    except Exception:
        pass
    if vmem_cap >= (96 << 20):          # v5e / v6e: 128 MiB physical VMEM
        return 12 << 20, 96 << 20
    return 6 << 20, 48 << 20            # v7x: 64 MiB physical VMEM


def _channel_tiles(C):
    """Legal channel tiles: multiples of 8 that divide C, plus C itself
    (keeps the sublane block dim either 8-aligned or full-extent)."""
    cands = {C}
    for t in range(8, C + 1, 8):
        if C % t == 0:
            cands.add(t)
    return sorted(cands)


def _pick_fused_tile(N, C, HW, itemsize, budget_bytes):
    """Largest legal channel tile whose full-reduction (N, TC, HW) block fits
    the per-block budget, preferring a grid of >= 4 (or >= 2) steps so the
    pipeline and megacore sharding stay active.  None if nothing fits."""
    cands = _channel_tiles(C)
    fitting = [t for t in cands if N * t * HW * itemsize <= budget_bytes]
    if not fitting:
        return None
    tc = max(fitting)
    for min_steps in (4, 2):
        pref = [t for t in fitting if C // t >= min_steps]
        if pref:
            tc = max(pref)
            break
    return tc


def _pick_two_phase_tiles(N, C, HW, itemsize, budget_bytes):
    """Tiles for the two-phase path: smallest legal channel tile, largest
    batch tile (divisor of N) whose block fits, then grow the channel tile."""
    cands = _channel_tiles(C)
    tc = cands[0]
    n_divs = [d for d in range(1, N + 1) if N % d == 0]
    fitting_tn = [d for d in n_divs if d * tc * HW * itemsize <= budget_bytes]
    tn = max(fitting_tn) if fitting_tn else 1
    # TODO(synk): if even a (1, tc, HW) block exceeds the budget (multi-MiB
    # single spatial row), additionally split HW as a reduction axis.
    for t in cands:
        if tn * t * HW * itemsize <= budget_bytes:
            tc = max(tc, t)
    return tc, tn


# ----------------------------------------------------------------------------
# Wrappers
# ----------------------------------------------------------------------------
def _batch_norm2d_fused(x3d, weight, bias, TC, vmem_limit):
    N, C, HW = x3d.shape
    w3d = weight.reshape(1, C, 1)
    b3d = bias.reshape(1, C, 1)
    return pl.pallas_call(
        _bn2d_fused_kernel,
        out_shape=jax.ShapeDtypeStruct((N, C, HW), x3d.dtype),
        grid_spec=pltpu.PrefetchScalarGridSpec(
            num_scalar_prefetch=0,
            grid=(C // TC,),
            in_specs=[
                pl.BlockSpec((N, TC, HW), lambda c: (0, c, 0)),
                pl.BlockSpec((1, TC, 1), lambda c: (0, c, 0)),
                pl.BlockSpec((1, TC, 1), lambda c: (0, c, 0)),
            ],
            out_specs=pl.BlockSpec((N, TC, HW), lambda c: (0, c, 0)),
        ),
        compiler_params=pltpu.CompilerParams(
            dimension_semantics=("parallel",),   # channel tiles are independent
            vmem_limit_bytes=vmem_limit,
        ),
    )(x3d, w3d, b3d)


def _batch_norm2d_two_phase(x3d, weight, bias, TC, TN, vmem_limit):
    N, C, HW = x3d.shape
    count = float(N * HW)

    # Phase A: per-channel sum & sum-of-squares, accumulated across batch tiles.
    sums, ssqs = pl.pallas_call(
        _bn2d_stats_kernel,
        out_shape=(jax.ShapeDtypeStruct((C, 1), jnp.float32),
                   jax.ShapeDtypeStruct((C, 1), jnp.float32)),
        grid_spec=pltpu.PrefetchScalarGridSpec(
            num_scalar_prefetch=0,
            grid=(C // TC, N // TN),
            in_specs=[pl.BlockSpec((TN, TC, HW), lambda c, m: (m, c, 0))],
            out_specs=(pl.BlockSpec((TC, 1), lambda c, m: (c, 0)),
                       pl.BlockSpec((TC, 1), lambda c, m: (c, 0))),
        ),
        compiler_params=pltpu.CompilerParams(
            dimension_semantics=("parallel", "arbitrary"),
            vmem_limit_bytes=vmem_limit,
        ),
    )(x3d)

    # Tiny per-channel math (C-sized) in plain JAX.
    wf = weight.astype(jnp.float32).reshape(C, 1)
    bf = bias.astype(jnp.float32).reshape(C, 1)
    mean = sums / count
    var = jnp.maximum(ssqs / count - mean * mean, 0.0)
    inv = jax.lax.rsqrt(var + EPS)
    scale = (inv * wf).reshape(1, C, 1)
    shift = (bf - mean * inv * wf).reshape(1, C, 1)

    # Phase B: normalize sweep (fully parallel grid).
    return pl.pallas_call(
        _bn2d_norm_kernel,
        out_shape=jax.ShapeDtypeStruct((N, C, HW), x3d.dtype),
        grid_spec=pltpu.PrefetchScalarGridSpec(
            num_scalar_prefetch=0,
            grid=(C // TC, N // TN),
            in_specs=[
                pl.BlockSpec((TN, TC, HW), lambda c, m: (m, c, 0)),
                pl.BlockSpec((1, TC, 1), lambda c, m: (0, c, 0)),
                pl.BlockSpec((1, TC, 1), lambda c, m: (0, c, 0)),
            ],
            out_specs=pl.BlockSpec((TN, TC, HW), lambda c, m: (m, c, 0)),
        ),
        compiler_params=pltpu.CompilerParams(
            dimension_semantics=("parallel", "parallel"),
            vmem_limit_bytes=vmem_limit,
        ),
    )(x3d, scale, shift)


def batch_norm2d(x, weight, bias):
    """Matches F.batch_norm(input, None, None, weight, bias, True).

    x: (N, C, H, W); weight/bias: (C,)
    """
    N, C, H, W = x.shape
    HW = H * W
    x3d = x.reshape(N, C, HW)          # free reshape, no transpose

    budget, vmem_limit = _vmem_budgets()
    TC = _pick_fused_tile(N, C, HW, x.dtype.itemsize, budget)
    if TC is not None:
        out3d = _batch_norm2d_fused(x3d, weight, bias, TC, vmem_limit)
    else:
        TC2, TN = _pick_two_phase_tiles(N, C, HW, x.dtype.itemsize, budget)
        out3d = _batch_norm2d_two_phase(x3d, weight, bias, TC2, TN, vmem_limit)
    return out3d.reshape(N, C, H, W)


# ----------------------------------------------------------------------------
# Self test
# ----------------------------------------------------------------------------
if __name__ == "__main__":
    key = jax.random.PRNGKey(0)
    N, C, H, W = 2, 4, 16, 16
    x = jax.random.normal(key, (N, C, H, W), dtype=jnp.float32)

    # deterministic params, matching nn.init.ones_ / nn.init.zeros_
    weight = jnp.ones((C,), dtype=jnp.float32)
    bias = jnp.zeros((C,), dtype=jnp.float32)

    # pure-JAX reference
    mean = jnp.mean(x, axis=(0, 2, 3), keepdims=True)
    var = jnp.mean((x - mean) ** 2, axis=(0, 2, 3), keepdims=True)
    ref = ((x - mean) * jax.lax.rsqrt(var + EPS)
           * weight.reshape(1, C, 1, 1) + bias.reshape(1, C, 1, 1))

    # Fused (default) path.
    out = jax.block_until_ready(batch_norm2d(x, weight, bias))
    assert jnp.allclose(out, ref, atol=1e-4, rtol=1e-4), "fused path mismatch"

    # Exercise the two-phase fallback path as well (forced tiling).
    _, vlim = _vmem_budgets()
    out2 = _batch_norm2d_two_phase(x.reshape(N, C, H * W), weight, bias, C, 1, vlim)
    out2 = jax.block_until_ready(out2).reshape(N, C, H, W)
    assert jnp.allclose(out2, ref, atol=1e-4, rtol=1e-4), "two-phase path mismatch"

    print("KERNEL_OK")
</pallas_src>

<mosaic_0001>
module attributes {stable_mosaic.version = 11 : i64} {
  func.func @_bn2d_fused_kernel(%arg0: i32, %arg1: memref<2x4x256xf32, #tpu.memory_space<vmem>>, %arg2: memref<1x4x1xf32, #tpu.memory_space<vmem>>, %arg3: memref<1x4x1xf32, #tpu.memory_space<vmem>>, %arg4: memref<2x4x256xf32, #tpu.memory_space<vmem>>) attributes {dimension_semantics = [#tpu.dimension_semantics<parallel>], iteration_bounds = array<i64: 1>, scalar_prefetch = 0 : i64, scratch_operands = 0 : i64, tpu.core_type = #tpu.core_type<tc>, window_params = [{transform_indices = @transform_0, window_bounds = array<i64: 2, 4, 256>}, {transform_indices = @transform_1, window_bounds = array<i64: 1, 4, 1>}, {transform_indices = @transform_2, window_bounds = array<i64: 1, 4, 1>}, {transform_indices = @transform_3, window_bounds = array<i64: 2, 4, 256>}]} {
    %cst = arith.constant 0.000000e+00 : f32
    %0 = vector.broadcast %cst : f32 to vector<4x256xf32>
    %cst_0 = arith.constant 0.000000e+00 : f32
    %1 = vector.broadcast %cst_0 : f32 to vector<4x256xf32>
    %c0 = arith.constant 0 : index
    %c0_1 = arith.constant 0 : index
    %c0_2 = arith.constant 0 : index
    %2 = vector.load %arg1[%c0, %c0_1, %c0_2] : memref<2x4x256xf32, #tpu.memory_space<vmem>>, vector<1x4x256xf32>
    %3 = vector.shape_cast %2 : vector<1x4x256xf32> to vector<4x256xf32>
    %4 = arith.addf %0, %3 : vector<4x256xf32>
    %5 = arith.mulf %3, %3 : vector<4x256xf32>
    %6 = arith.addf %1, %5 : vector<4x256xf32>
    %c1 = arith.constant 1 : index
    %c0_3 = arith.constant 0 : index
    %c0_4 = arith.constant 0 : index
    %7 = vector.load %arg1[%c1, %c0_3, %c0_4] : memref<2x4x256xf32, #tpu.memory_space<vmem>>, vector<1x4x256xf32>
    %8 = vector.shape_cast %7 : vector<1x4x256xf32> to vector<4x256xf32>
    %9 = arith.addf %4, %8 : vector<4x256xf32>
    %10 = arith.mulf %8, %8 : vector<4x256xf32>
    %11 = arith.addf %6, %10 : vector<4x256xf32>
    %cst_5 = arith.constant dense<0.000000e+00> : vector<4xf32>
    %12 = vector.multi_reduction <add>, %9, %cst_5 [1] : vector<4x256xf32> to vector<4xf32>
    %13 = vector.shape_cast %12 : vector<4xf32> to vector<4x1xf32>
    %cst_6 = arith.constant dense<0.000000e+00> : vector<4xf32>
    %14 = vector.multi_reduction <add>, %11, %cst_6 [1] : vector<4x256xf32> to vector<4xf32>
    %15 = vector.shape_cast %14 : vector<4xf32> to vector<4x1xf32>
    %cst_7 = arith.constant 0.001953125 : f32
    %16 = vector.broadcast %cst_7 : f32 to vector<4x1xf32>
    %17 = arith.mulf %13, %16 : vector<4x1xf32>
    %cst_8 = arith.constant 0.001953125 : f32
    %18 = vector.broadcast %cst_8 : f32 to vector<4x1xf32>
    %19 = arith.mulf %15, %18 : vector<4x1xf32>
    %20 = arith.mulf %17, %17 : vector<4x1xf32>
    %21 = arith.subf %19, %20 : vector<4x1xf32>
    %cst_9 = arith.constant 0.000000e+00 : f32
    %22 = vector.broadcast %cst_9 : f32 to vector<4x1xf32>
    %23 = arith.maximumf %21, %22 : vector<4x1xf32>
    %cst_10 = arith.constant 9.99999974E-6 : f32
    %24 = vector.broadcast %cst_10 : f32 to vector<4x1xf32>
    %25 = arith.addf %23, %24 : vector<4x1xf32>
    %26 = math.rsqrt %25 : vector<4x1xf32>
    %c0_11 = arith.constant 0 : index
    %c0_12 = arith.constant 0 : index
    %c0_13 = arith.constant 0 : index
    %27 = vector.load %arg2[%c0_11, %c0_12, %c0_13] : memref<1x4x1xf32, #tpu.memory_space<vmem>>, vector<1x4x1xf32>
    %28 = vector.shape_cast %27 : vector<1x4x1xf32> to vector<4x1xf32>
    %29 = arith.mulf %26, %28 : vector<4x1xf32>
    %c0_14 = arith.constant 0 : index
    %c0_15 = arith.constant 0 : index
    %c0_16 = arith.constant 0 : index
    %30 = vector.load %arg3[%c0_14, %c0_15, %c0_16] : memref<1x4x1xf32, #tpu.memory_space<vmem>>, vector<1x4x1xf32>
    %31 = vector.shape_cast %30 : vector<1x4x1xf32> to vector<4x1xf32>
    %32 = arith.mulf %17, %29 : vector<4x1xf32>
    %33 = arith.subf %31, %32 : vector<4x1xf32>
    %c0_17 = arith.constant 0 : index
    %c0_18 = arith.constant 0 : index
    %c0_19 = arith.constant 0 : index
    %34 = vector.load %arg1[%c0_17, %c0_18, %c0_19] : memref<2x4x256xf32, #tpu.memory_space<vmem>>, vector<1x4x256xf32>
    %35 = vector.shape_cast %34 : vector<1x4x256xf32> to vector<4x256xf32>
    %36 = vector.broadcast %29 : vector<4x1xf32> to vector<4x256xf32>
    %37 = arith.mulf %35, %36 : vector<4x256xf32>
    %38 = vector.broadcast %33 : vector<4x1xf32> to vector<4x256xf32>
    %39 = arith.addf %37, %38 : vector<4x256xf32>
    %c0_20 = arith.constant 0 : index
    %c0_21 = arith.constant 0 : index
    %c0_22 = arith.constant 0 : index
    %40 = vector.load %arg4[%c0_20, %c0_21, %c0_22] : memref<2x4x256xf32, #tpu.memory_space<vmem>>, vector<1x4x256xf32>
    %41 = vector.shape_cast %40 : vector<1x4x256xf32> to vector<4x256xf32>
    %42 = vector.shape_cast %39 : vector<4x256xf32> to vector<1x4x256xf32>
    tpu.vector_store %arg4[%c0_20, %c0_21, %c0_22], %42 {strides = array<i32>} : memref<2x4x256xf32, #tpu.memory_space<vmem>>, vector<1x4x256xf32>,
    %c1_23 = arith.constant 1 : index
    %c0_24 = arith.constant 0 : index
    %c0_25 = arith.constant 0 : index
    %43 = vector.load %arg1[%c1_23, %c0_24, %c0_25] : memref<2x4x256xf32, #tpu.memory_space<vmem>>, vector<1x4x256xf32>
    %44 = vector.shape_cast %43 : vector<1x4x256xf32> to vector<4x256xf32>
    %45 = vector.broadcast %29 : vector<4x1xf32> to vector<4x256xf32>
    %46 = arith.mulf %44, %45 : vector<4x256xf32>
    %47 = vector.broadcast %33 : vector<4x1xf32> to vector<4x256xf32>
    %48 = arith.addf %46, %47 : vector<4x256xf32>
    %c1_26 = arith.constant 1 : index
    %c0_27 = arith.constant 0 : index
    %c0_28 = arith.constant 0 : index
    %49 = vector.load %arg4[%c1_26, %c0_27, %c0_28] : memref<2x4x256xf32, #tpu.memory_space<vmem>>, vector<1x4x256xf32>
    %50 = vector.shape_cast %49 : vector<1x4x256xf32> to vector<4x256xf32>
    %51 = vector.shape_cast %48 : vector<4x256xf32> to vector<1x4x256xf32>
    tpu.vector_store %arg4[%c1_26, %c0_27, %c0_28], %51 {strides = array<i32>} : memref<2x4x256xf32, #tpu.memory_space<vmem>>, vector<1x4x256xf32>,
    return
  }
  func.func @transform_0(%arg0: i32) -> (i32, i32, i32) {
    %c0_i32 = arith.constant 0 : i32
    %c0_i32_0 = arith.constant 0 : i32
    %c0_i32_1 = arith.constant 0 : i32
    return %c0_i32, %arg0, %c0_i32_0 : i32, i32, i32
  }
  func.func @transform_1(%arg0: i32) -> (i32, i32, i32) {
    %c0_i32 = arith.constant 0 : i32
    %c0_i32_0 = arith.constant 0 : i32
    %c0_i32_1 = arith.constant 0 : i32
    return %c0_i32, %arg0, %c0_i32_0 : i32, i32, i32
  }
  func.func @transform_2(%arg0: i32) -> (i32, i32, i32) {
    %c0_i32 = arith.constant 0 : i32
    %c0_i32_0 = arith.constant 0 : i32
    %c0_i32_1 = arith.constant 0 : i32
    return %c0_i32, %arg0, %c0_i32_0 : i32, i32, i32
  }
  func.func @transform_3(%arg0: i32) -> (i32, i32, i32) {
    %c0_i32 = arith.constant 0 : i32
    %c0_i32_0 = arith.constant 0 : i32
    %c0_i32_1 = arith.constant 0 : i32
    return %c0_i32, %arg0, %c0_i32_0 : i32, i32, i32
  }
}

</mosaic_0001>

<llo_original>
// kernel: tpu_custom_call.1
$region0: #{tpu_custom_call.1}
  #allocation0 [shape = 'u32[]', space=smem, size = 0x4, offset = 0x4, fixed_abs, tag = 'smem constant byte address 0x4 - core index']
  #allocation1 [shape = 'u32[144,128]{1,0:T(1,128)}', space=vmem, size = 0x12000, scoped, tag = 'internal scratch']
  %s0 = inlined_call_operand.hbm [shape: f32[2,4,256], index: 0, kind: input, shape index: {}]
  %s1 = inlined_call_operand.vmem [shape: f32[1,4,1], index: 1, kind: input, shape index: {}]
  %s2 = inlined_call_operand.vmem [shape: f32[1,4,1], index: 2, kind: input, shape index: {}]
  %s3 = inlined_call_operand.hbm [shape: f32[2,4,256], index: 3, kind: output, shape index: {}]
  %s4 = sld [smem:[#allocation0]]
  $region26: #{tpu_custom_call.1} parent=0
    _
  %s6 = ssub.s32 1, %s4
  %s7 = scalar_select 0, %s6, %s4
  $region1: #{tpu_custom_call.1} parent=0
    #allocation2 [shape = 'u8[8192]{0}', space=vmem, size = 0x2000, scoped, tag = 'input window, operand 0, single buffered']
    #allocation3 [shape = 's32[1]{0}', space=sflag, size = 0x4, scoped, tag = 'scoped memory for tpu_custom_call.1']
    #allocation4 [shape = 's32[1]{0}', space=sflag, size = 0x4, scoped, tag = 'scoped memory for tpu_custom_call.1']
    #allocation5 [shape = 'u8[8192]{0}', space=vmem, size = 0x2000, scoped, tag = 'output window, operand 0, single buffered']
    %8 = vsyncpa [#allocation3], 0
    %9 = vsyncpa [#allocation4], 0
    // Predicated region
    $region2: #{tpu_custom_call.1} parent=1 // pred_check
      _
    $region3: #{tpu_custom_call.1} parent=1 // pred_check_branch
      %11 = sbr.rel (0) target = $region5
    $region4: #{tpu_custom_call.1} parent=1 // pred_region
      %s13 = ssub.s32 256, 256
      %14 = vsyncadd [#allocation3], %s13
      %s15 = sshll.u32 [#allocation2], 4
      %s16 = int_to_ptr.vmem [resolvable:$true] %s15
      %21 = dma.hbm_to_vmem [thread:$0]  %s0, 256, %s16, [#allocation3], 128, 128, 8
    $region5: #{tpu_custom_call.1} parent=1 // pred_fallthru
      _
    // Predicated region
    $region6: #{tpu_custom_call.1} parent=1 // pred_check
      _
    $region7: #{tpu_custom_call.1} parent=1 // pred_check_branch
      %23 = sbr.rel (0) target = $region9
    $region8: #{tpu_custom_call.1} parent=1 // pred_region
      _
    $region9: #{tpu_custom_call.1} parent=1 // pred_fallthru
      _
    // Predicated region
    $region10: #{tpu_custom_call.1} parent=1 // pred_check
      _
    $region11: #{tpu_custom_call.1} parent=1 // pred_check_branch
      %25 = sbr.rel (0) target = $region13
    $region12: #{tpu_custom_call.1} parent=1 // pred_region
      _
    $region13: #{tpu_custom_call.1} parent=1 // pred_fallthru
      _
    // Predicated region
    $region14: #{tpu_custom_call.1} parent=1 // pred_check
      _
    $region15: #{tpu_custom_call.1} parent=1 // pred_check_branch
      %27 = sbr.rel (0) target = $region17
    $region16: #{tpu_custom_call.1} parent=1 // pred_region
      %28 = dma.done [#allocation3], 256
    $region17: #{tpu_custom_call.1} parent=1 // pred_fallthru
      _
    %v29 = vld [vmem:[#allocation2] sm:$0xff]
    %v30 = vadd.f32 %v29, 0.0
    %v31 = vmul.f32 %v29, %v29
    %v32 = vadd.f32 %v31, 0.0
    %s33 = scalar_lea.vmem [#allocation2], 8
    %v34 = vld [vmem:[%s33] sm:$0xff]
    %v35 = vadd.f32 %v30, %v34
    %v36 = vmul.f32 %v34, %v34
    %v37 = vadd.f32 %v32, %v36
    %v39 = vcombine.high %v35, %v35
    %vm41 = vcmask 1043456
    %v42 = vsel %vm41, %v35, 0.0
    %v43 = vsel %vm41, %v39, 0.0
    %v44 = vadd.f32 %v42, %v43
    %45 = vadd.xlane.f32.xlu0 %v44
    %v46 = vpop.xlane.xlu0 %45
    %v48 = vcombine.high %v37, %v37
    %v50 = vsel %vm41, %v37, 0.0
    %v51 = vsel %vm41, %v48, 0.0
    %v52 = vadd.f32 %v50, %v51
    %53 = vadd.xlane.f32.xlu0 %v52
    %v54 = vpop.xlane.xlu0 %53
    %v55 = vmul.f32 %v46, 0.001953125
    %v56 = vmul.f32 %v54, 0.001953125
    %v57 = vmul.f32 %v55, %v55
    %v58 = vsub.f32 %v56, %v57
    %v59 = vmax.f32 %v58, 0.0
    %v60 = vadd.f32 %v59, 1e-05
    %v61 = vrsqrt.pop %v60
    %v62 = vld [vmem:[%s1] sm:$0xf]
    %v63 = vmul.f32 %v61, %v62
    %v64 = vld [vmem:[%s2] sm:$0xf]
    %v65 = vmul.f32 %v55, %v63
    %v66 = vsub.f32 %v64, %v65
    %68 = vset.pattern.permute.xlu0 0
    %69 = vperm.xlu0 %68, %v63
    %v70 = vpop.permute.xlu0 %69
    %v72 = vunpack.c.l.s4 839922192
    %v73 = vunpack.c.0.s8 %v72
    %v74 = vlaneseq
    %v75 = vshrl.u32 %v74, 7
    %v76 = vsub.s32 %v73, %v75
    %v77 = vrot.slane %v70, %v76
    %v79 = vmul.f32 %v29, %v77
    %81 = vset.pattern.permute.xlu0 0
    %82 = vperm.xlu0 %81, %v66
    %v83 = vpop.permute.xlu0 %82
    %v85 = vunpack.c.l.s4 839922192
    %v86 = vunpack.c.0.s8 %v85
    %v87 = vlaneseq
    %v88 = vshrl.u32 %v87, 7
    %v89 = vsub.s32 %v86, %v88
    %v90 = vrot.slane %v83, %v89
    %v92 = vadd.f32 %v79, %v90
    %93 = vst [vmem:[#allocation5] sm:$0xff] %v92
    %v94 = vld [vmem:[%s33] sm:$0xff]
    %v95 = vmul.f32 %v94, %v77
    %v96 = vadd.f32 %v95, %v90
    %s97 = scalar_lea.vmem [#allocation5], 8
    %98 = vst [vmem:[%s97] sm:$0xff] %v96
    // Predicated region
    $region18: #{tpu_custom_call.1} parent=1 // pred_check
      _
    $region19: #{tpu_custom_call.1} parent=1 // pred_check_branch
      %100 = sbr.rel (0) target = $region21
    $region20: #{tpu_custom_call.1} parent=1 // pred_region
      %s102 = ssub.s32 256, 256
      %103 = vsyncadd [#allocation4], %s102
      %s104 = sshll.u32 [#allocation5], 4
      %s105 = int_to_ptr.vmem [resolvable:$true] %s104
      %110 = dma.vmem_to_hbm [thread:$0]  %s105, 256, %s3, [#allocation4], 128, 128, 8
    $region21: #{tpu_custom_call.1} parent=1 // pred_fallthru
      _
    // Predicated region
    $region22: #{tpu_custom_call.1} parent=1 // pred_check
      _
    $region23: #{tpu_custom_call.1} parent=1 // pred_check_branch
      %112 = sbr.rel (0) target = $region25
    $region24: #{tpu_custom_call.1} parent=1 // pred_region
      %113 = dma.done [#allocation4], 256
    $region25: #{tpu_custom_call.1} parent=1 // pred_fallthru
      _
    %114 = vsyncpa [#allocation3], 1
    %115 = vsyncpa [#allocation4], 1

</llo_original>
